<compile_context>
chip_gen: v6e
topology: v6e:2x2x1
jax: 0.10.0
libtpu: 0.0.40
codegen_flags: <defaults>
</compile_context>

<pallas_src>
import functools

import jax
import jax.numpy as jnp
from jax import lax
from jax.experimental import pallas as pl
from jax.experimental.pallas import tpu as pltpu


def _round_up(x, m):
    return ((x + m - 1) // m) * m


def _ttt_chunk_kernel(x_ref, th_ref, wt0_ref, b0_ref, out_ref, wt_s, b_s,
                      *, d1, d1p, chunk, lr, t_total):
    C = chunk
    f32 = jnp.float32
    bf16 = jnp.bfloat16

    # (Re-)initialize the inner-model state at the first chunk of every
    # sequence; it persists in scratch across the sequential chunk axis.
    @pl.when(pl.program_id(1) == 0)
    def _init():
        wt_s[...] = wt0_ref[...]
        b_s[...] = b0_ref[...]

    # ---- batched projections for the whole chunk (one wide bf16 MXU matmul)
    x = x_ref[0]                                                    # (C, d2)
    kvq = jnp.dot(x.astype(bf16), th_ref[...].astype(bf16),
                  preferred_element_type=f32)                       # (C, 3*d1p)
    k = kvq[:, 0 * d1p:1 * d1p]                                     # train view
    v = kvq[:, 1 * d1p:2 * d1p]                                     # label view
    q = kvq[:, 2 * d1p:3 * d1p]                                     # test view
    kb = k.astype(bf16)
    qb = q.astype(bf16)

    wt0 = wt_s[...]                                                 # (d1p, d1p) f32
    b0 = b_s[...]                                                   # (1, d1p)   f32
    wt0b = wt0.astype(bf16)

    # Residual of the not-yet-updated model on the training views.
    z = jnp.dot(kb, wt0b, preferred_element_type=f32) + b0 - v      # (C, d1p)

    # Gram K K^T with the "+1" bias coupling, strictly causal, pre-scaled so
    # the solve has no extra multiplies:  P = -(2*lr/d1) * strict_tril(KK^T+1)
    row = lax.broadcasted_iota(jnp.int32, (C, C), 0)
    col = lax.broadcasted_iota(jnp.int32, (C, C), 1)
    kk = lax.dot_general(kb, kb, (((1,), (1,)), ((), ())),
                         preferred_element_type=f32)                # (C, C)
    a = 2.0 * lr / d1
    P = jnp.where(col < row, (-a) * (kk + 1.0), 0.0)                # f32, nilpotent

    # ---- solve (I - P) G = (2/d1) Z with the doubling Neumann product -----
    #   (I - P)^{-1} = (I + P)(I + P^2)(I + P^4)... , exact since P^C = 0.
    # log2(C) pairs of full-tile MXU matmuls; kept in f32.
    G = (2.0 / d1) * z                                              # (C, d1p)
    n_levels = (C - 1).bit_length()
    for lvl in range(n_levels):
        G = G + jnp.dot(P, G, preferred_element_type=f32)
        if lvl + 1 < n_levels:
            P = jnp.dot(P, P, preferred_element_type=f32)

    # Mask padded tail tokens so they never feed the carried (Wt, b) state.
    valid = t_total - pl.program_id(1) * C
    ridx = lax.broadcasted_iota(jnp.int32, (C, 1), 0)
    G = jnp.where(ridx < valid, G, 0.0)
    Gb = G.astype(bf16)

    # ---- batched outputs with each token's *updated* state (dual form) ----
    #   out_s = q_s @ Wt0 + b0 - lr * sum_{r<=s} (Q_s.K_r + 1) g_r
    qk = lax.dot_general(qb, kb, (((1,), (1,)), ((), ())),
                         preferred_element_type=f32)                # (C, C)
    cmat = jnp.where(col <= row, qk + 1.0, 0.0)
    out = (jnp.dot(qb, wt0b, preferred_element_type=f32) + b0
           - lr * jnp.dot(cmat.astype(bf16), Gb, preferred_element_type=f32))
    out_ref[0] = out.astype(out_ref.dtype)                          # lane-dense tile

    # ---- chunk-level state update: Wt -= lr * K^T G, b -= lr * sum_t g_t ---
    ktg = lax.dot_general(kb, Gb, (((0,), (0,)), ((), ())),
                          preferred_element_type=f32)               # (d1p, d1p)
    wt_s[...] = wt0 - lr * ktg
    b_s[...] = b0 - lr * jnp.sum(G, axis=0, keepdims=True)


def ttt_layer(in_seq, theta_k, theta_v, theta_q, w0, b0, lr=0.1, chunk=256):
    """in_seq: (T, d2) or (B, T, d2); theta_*: (d1, d2); w0: (d1, d1); b0: (d1,).

    Returns (T, d1) or (B, T, d1) float32.
    chunk=256 fills the v6e/v7x 256-wide MXU; prefer chunk=128 on v5e.
    """
    squeeze = (in_seq.ndim == 2)
    x = in_seq[None] if squeeze else in_seq
    B, T, d2 = x.shape
    d1 = theta_k.shape[0]
    d1p = _round_up(d1, 128)                     # lane-dense output / MXU N-fill

    C = int(min(chunk, T))
    C = _round_up(C, 8)                          # sublane alignment for BlockSpecs
    num_chunks = pl.cdiv(T, C)
    Tp = num_chunks * C
    if Tp != T:
        x = jnp.pad(x, ((0, 0), (0, Tp - T), (0, 0)))

    # Concatenated, pre-transposed projection weights, each head padded to d1p
    # so the kernel slices land on lane-dense boundaries.  Padded rows/cols of
    # W0/b0 are zero and stay zero for the whole sequence.
    def pad_rows(th):
        return jnp.pad(th, ((0, d1p - d1), (0, 0)))
    theta_kvq_t = jnp.concatenate(
        [pad_rows(theta_k), pad_rows(theta_v), pad_rows(theta_q)], axis=0).T  # (d2, 3*d1p)
    w0t = jnp.pad(w0.T, ((0, d1p - d1), (0, d1p - d1)))
    b0p = jnp.pad(b0.reshape(1, d1), ((0, 0), (0, d1p - d1)))

    kernel = functools.partial(_ttt_chunk_kernel, d1=d1, d1p=d1p, chunk=C,
                               lr=float(lr), t_total=T)

    # VMEM budget: double-buffered x/out tiles + resident params + live values
    # + carried state.  Cap well below physical VMEM (v7x TC has only 64 MiB).
    est_bytes = 4 * (2 * C * d2 + 2 * C * d1p
                     + 2 * (d2 * 3 * d1p + d1p * d1p + d1p)
                     + 4 * C * d1p + 3 * C * C
                     + d1p * d1p + d1p)
    try:
        info = pltpu.get_tpu_info()
        phys_vmem = int(getattr(info, "vmem_capacity_bytes", 64 * 2 ** 20))
    except Exception:  # pragma: no cover - conservative fallback
        phys_vmem = 64 * 2 ** 20
    vmem_limit = int(min(max(2 * est_bytes, 16 * 2 ** 20), (3 * phys_vmem) // 4))

    out = pl.pallas_call(
        kernel,
        out_shape=jax.ShapeDtypeStruct((B, Tp, d1p), jnp.float32),
        grid=(B, num_chunks),
        in_specs=[
            pl.BlockSpec((1, C, d2), lambda b, i: (b, i, 0)),        # token chunk
            pl.BlockSpec((d2, 3 * d1p), lambda b, i: (0, 0)),        # theta_KVQ^T (resident)
            pl.BlockSpec((d1p, d1p), lambda b, i: (0, 0)),           # W0^T (resident)
            pl.BlockSpec((1, d1p), lambda b, i: (0, 0)),             # b0 (resident)
        ],
        out_specs=pl.BlockSpec((1, C, d1p), lambda b, i: (b, i, 0)),  # lane-dense writeback
        scratch_shapes=[
            pltpu.VMEM((d1p, d1p), jnp.float32),   # Wt state (carried across chunks)
            pltpu.VMEM((1, d1p), jnp.float32),     # b state
        ],
        compiler_params=pltpu.CompilerParams(
            # batch axis parallel (megacore on v7x); chunk axis carries state.
            dimension_semantics=("parallel", "arbitrary"),
            vmem_limit_bytes=vmem_limit,
        ),
    )(x, theta_kvq_t, w0t, b0p)

    out = out[:, :T, :d1]
    return out[0] if squeeze else out


def ttt_layer_ref(in_seq, theta_k, theta_v, theta_q, w0, b0, lr=0.1):
    """Pure-JAX reference (same math, strictly token-by-token, f32)."""
    d1 = w0.shape[0]
    W, b = w0, b0
    outs = []
    for t in range(in_seq.shape[0]):
        xt = in_seq[t]
        k = theta_k @ xt
        v = theta_v @ xt
        q = theta_q @ xt
        pred = W @ k + b
        g = (2.0 / d1) * (pred - v)
        W = W - lr * jnp.outer(g, k)
        b = b - lr * g
        outs.append(W @ q + b)
    return jnp.stack(outs)


if __name__ == "__main__":
    d1, d2 = 32, 32
    lr = 0.1
    # Tolerance is loose because bulk matmuls use bf16 operands (MXU-native
    # rate); the solve and state accumulation stay in f32.
    TOL = 5e-2

    key = jax.random.PRNGKey(0)
    k_x, k_tk, k_tv, k_tq, k_w, k_b, k_x2 = jax.random.split(key, 7)

    theta_k = jax.random.normal(k_tk, (d1, d2), jnp.float32) / jnp.sqrt(d2)
    theta_v = jax.random.normal(k_tv, (d1, d2), jnp.float32) / jnp.sqrt(d2)
    theta_q = jax.random.normal(k_tq, (d1, d2), jnp.float32) / jnp.sqrt(d2)
    bound = 1.0 / jnp.sqrt(d1)
    w0 = jax.random.uniform(k_w, (d1, d1), jnp.float32, -bound, bound)
    b0 = jax.random.uniform(k_b, (d1,), jnp.float32, -bound, bound)

    # --- test 1: single sequence, single chunk -----------------------------
    T = 8
    in_seq = jax.random.normal(k_x, (T, d2), dtype=jnp.float32)
    out = jax.block_until_ready(
        ttt_layer(in_seq, theta_k, theta_v, theta_q, w0, b0, lr=lr))
    ref = ttt_layer_ref(in_seq, theta_k, theta_v, theta_q, w0, b0, lr=lr)
    assert out.shape == (T, d1)
    err = float(jnp.max(jnp.abs(out - ref)))
    assert err < TOL, f"single-chunk max abs err {err}"

    # --- test 2: batched, multi-chunk (state carried across grid steps) ----
    B, T2 = 2, 20
    xb = jax.random.normal(k_x2, (B, T2, d2), dtype=jnp.float32)
    outb = jax.block_until_ready(
        ttt_layer(xb, theta_k, theta_v, theta_q, w0, b0, lr=lr, chunk=8))
    assert outb.shape == (B, T2, d1)
    for bi in range(B):
        refb = ttt_layer_ref(xb[bi], theta_k, theta_v, theta_q, w0, b0, lr=lr)
        err = float(jnp.max(jnp.abs(outb[bi] - refb)))
        assert err < TOL, f"batched/multi-chunk max abs err {err} (batch {bi})"

    print("KERNEL_OK")
</pallas_src>

<mosaic_0001>
module attributes {stable_mosaic.version = 11 : i64} {
  func.func @_ttt_chunk_kernel(%arg0: i32, %arg1: i32, %arg2: memref<1x8x32xf32, #tpu.memory_space<vmem>>, %arg3: memref<32x384xf32, #tpu.memory_space<vmem>>, %arg4: memref<128x128xf32, #tpu.memory_space<vmem>>, %arg5: memref<1x128xf32, #tpu.memory_space<vmem>>, %arg6: memref<1x8x128xf32, #tpu.memory_space<vmem>>, %arg7: memref<128x128xf32, #tpu.memory_space<vmem>>, %arg8: memref<1x128xf32, #tpu.memory_space<vmem>>) attributes {dimension_semantics = [#tpu.dimension_semantics<parallel>, #tpu.dimension_semantics<arbitrary>], iteration_bounds = array<i64: 1, 1>, scalar_prefetch = 0 : i64, scratch_operands = 2 : i64, tpu.core_type = #tpu.core_type<tc>, window_params = [{transform_indices = @transform_0, window_bounds = array<i64: 1, 8, 32>}, {pipeline_mode = #tpu.pipeline_mode<synchronous>, transform_indices = @transform_1, window_bounds = array<i64: 32, 384>}, {pipeline_mode = #tpu.pipeline_mode<synchronous>, transform_indices = @transform_2, window_bounds = array<i64: 128, 128>}, {pipeline_mode = #tpu.pipeline_mode<synchronous>, transform_indices = @transform_3, window_bounds = array<i64: 1, 128>}, {transform_indices = @transform_4, window_bounds = array<i64: 1, 8, 128>}]} {
    %c0_i32 = arith.constant 0 : i32
    %0 = arith.cmpi eq, %arg1, %c0_i32 : i32
    %1 = arith.extui %0 : i1 to i32
    %c0_i32_0 = arith.constant 0 : i32
    %2 = arith.cmpi ne, %1, %c0_i32_0 : i32
    scf.if %2 {
      %c0_39 = arith.constant 0 : index
      %c0_40 = arith.constant 0 : index
      %79 = vector.load %arg4[%c0_39, %c0_40] : memref<128x128xf32, #tpu.memory_space<vmem>>, vector<128x128xf32>
      %c0_41 = arith.constant 0 : index
      %c0_42 = arith.constant 0 : index
      %80 = vector.load %arg7[%c0_41, %c0_42] : memref<128x128xf32, #tpu.memory_space<vmem>>, vector<128x128xf32>
      tpu.vector_store %arg7[%c0_41, %c0_42], %79 {strides = array<i32>} : memref<128x128xf32, #tpu.memory_space<vmem>>, vector<128x128xf32>,
      %c0_43 = arith.constant 0 : index
      %c0_44 = arith.constant 0 : index
      %81 = vector.load %arg5[%c0_43, %c0_44] : memref<1x128xf32, #tpu.memory_space<vmem>>, vector<1x128xf32>
      %c0_45 = arith.constant 0 : index
      %c0_46 = arith.constant 0 : index
      %82 = vector.load %arg8[%c0_45, %c0_46] : memref<1x128xf32, #tpu.memory_space<vmem>>, vector<1x128xf32>
      tpu.vector_store %arg8[%c0_45, %c0_46], %81 {strides = array<i32>} : memref<1x128xf32, #tpu.memory_space<vmem>>, vector<1x128xf32>,
    } else {
    }
    %c0 = arith.constant 0 : index
    %c0_1 = arith.constant 0 : index
    %c0_2 = arith.constant 0 : index
    %3 = vector.load %arg2[%c0, %c0_1, %c0_2] : memref<1x8x32xf32, #tpu.memory_space<vmem>>, vector<1x8x32xf32>
    %4 = vector.shape_cast %3 : vector<1x8x32xf32> to vector<8x32xf32>
    %5 = arith.truncf %4 : vector<8x32xf32> to vector<8x32xbf16>
    %c0_3 = arith.constant 0 : index
    %c0_4 = arith.constant 0 : index
    %6 = vector.load %arg3[%c0_3, %c0_4] : memref<32x384xf32, #tpu.memory_space<vmem>>, vector<32x384xf32>
    %7 = arith.truncf %6 : vector<32x384xf32> to vector<32x384xbf16>
    %cst = arith.constant dense<0.000000e+00> : vector<8x384xf32>
    %8 = tpu.matmul %5, %7, %cst {dimension_numbers = #tpu.dot_dimension_numbers<[1], [0], [0], [1], [0, 0, 1, 1], [], []>} : vector<8x32xbf16>, vector<32x384xbf16>, vector<8x384xf32> -> vector<8x384xf32>
    %9 = vector.extract_strided_slice %8 {offsets = [0, 0], sizes = [8, 128], strides = [1, 1]} : vector<8x384xf32> to vector<8x128xf32>
    %10 = vector.extract_strided_slice %8 {offsets = [0, 128], sizes = [8, 128], strides = [1, 1]} : vector<8x384xf32> to vector<8x128xf32>
    %11 = vector.extract_strided_slice %8 {offsets = [0, 256], sizes = [8, 128], strides = [1, 1]} : vector<8x384xf32> to vector<8x128xf32>
    %12 = arith.truncf %9 : vector<8x128xf32> to vector<8x128xbf16>
    %13 = arith.truncf %11 : vector<8x128xf32> to vector<8x128xbf16>
    %c0_5 = arith.constant 0 : index
    %c0_6 = arith.constant 0 : index
    %14 = vector.load %arg7[%c0_5, %c0_6] : memref<128x128xf32, #tpu.memory_space<vmem>>, vector<128x128xf32>
    %c0_7 = arith.constant 0 : index
    %c0_8 = arith.constant 0 : index
    %15 = vector.load %arg8[%c0_7, %c0_8] : memref<1x128xf32, #tpu.memory_space<vmem>>, vector<1x128xf32>
    %16 = arith.truncf %14 : vector<128x128xf32> to vector<128x128xbf16>
    %cst_9 = arith.constant dense<0.000000e+00> : vector<8x128xf32>
    %17 = tpu.matmul %12, %16, %cst_9 {dimension_numbers = #tpu.dot_dimension_numbers<[1], [0], [0], [1], [0, 0, 1, 1], [], []>} : vector<8x128xbf16>, vector<128x128xbf16>, vector<8x128xf32> -> vector<8x128xf32>
    %18 = vector.broadcast %15 : vector<1x128xf32> to vector<8x128xf32>
    %19 = arith.addf %17, %18 : vector<8x128xf32>
    %20 = arith.subf %19, %10 : vector<8x128xf32>
    %21 = tpu.iota {dimensions = array<i32: 0>} : vector<8x8xi32>
    %22 = tpu.iota {dimensions = array<i32: 1>} : vector<8x8xi32>
    %cst_10 = arith.constant dense<0.000000e+00> : vector<8x8xf32>
    %23 = tpu.matmul %12, %12, %cst_10 {dimension_numbers = #tpu.dot_dimension_numbers<[1], [1], [0], [0], [0, 0, 1, 0], [], []>} : vector<8x128xbf16>, vector<8x128xbf16>, vector<8x8xf32> -> vector<8x8xf32>
    %24 = arith.cmpi slt, %22, %21 : vector<8x8xi32>
    %cst_11 = arith.constant 1.000000e+00 : f32
    %25 = vector.broadcast %cst_11 : f32 to vector<8x8xf32>
    %26 = arith.addf %23, %25 : vector<8x8xf32>
    %cst_12 = arith.constant -6.250000e-03 : f32
    %27 = vector.broadcast %cst_12 : f32 to vector<8x8xf32>
    %28 = arith.mulf %27, %26 : vector<8x8xf32>
    %cst_13 = arith.constant 0.000000e+00 : f32
    %29 = vector.broadcast %cst_13 : f32 to vector<8x8xf32>
    %30 = arith.select %24, %28, %29 : vector<8x8xi1>, vector<8x8xf32>
    %cst_14 = arith.constant 6.250000e-02 : f32
    %31 = vector.broadcast %cst_14 : f32 to vector<8x128xf32>
    %32 = arith.mulf %31, %20 : vector<8x128xf32>
    %cst_15 = arith.constant dense<0.000000e+00> : vector<8x128xf32>
    %33 = tpu.matmul %30, %32, %cst_15 {dimension_numbers = #tpu.dot_dimension_numbers<[1], [0], [0], [1], [0, 0, 1, 1], [], []>} : vector<8x8xf32>, vector<8x128xf32>, vector<8x128xf32> -> vector<8x128xf32>
    %34 = arith.addf %32, %33 : vector<8x128xf32>
    %cst_16 = arith.constant dense<0.000000e+00> : vector<8x8xf32>
    %35 = tpu.matmul %30, %30, %cst_16 {dimension_numbers = #tpu.dot_dimension_numbers<[1], [0], [0], [1], [0, 0, 1, 1], [], []>} : vector<8x8xf32>, vector<8x8xf32>, vector<8x8xf32> -> vector<8x8xf32>
    %cst_17 = arith.constant dense<0.000000e+00> : vector<8x128xf32>
    %36 = tpu.matmul %35, %34, %cst_17 {dimension_numbers = #tpu.dot_dimension_numbers<[1], [0], [0], [1], [0, 0, 1, 1], [], []>} : vector<8x8xf32>, vector<8x128xf32>, vector<8x128xf32> -> vector<8x128xf32>
    %37 = arith.addf %34, %36 : vector<8x128xf32>
    %cst_18 = arith.constant dense<0.000000e+00> : vector<8x8xf32>
    %38 = tpu.matmul %35, %35, %cst_18 {dimension_numbers = #tpu.dot_dimension_numbers<[1], [0], [0], [1], [0, 0, 1, 1], [], []>} : vector<8x8xf32>, vector<8x8xf32>, vector<8x8xf32> -> vector<8x8xf32>
    %cst_19 = arith.constant dense<0.000000e+00> : vector<8x128xf32>
    %39 = tpu.matmul %38, %37, %cst_19 {dimension_numbers = #tpu.dot_dimension_numbers<[1], [0], [0], [1], [0, 0, 1, 1], [], []>} : vector<8x8xf32>, vector<8x128xf32>, vector<8x128xf32> -> vector<8x128xf32>
    %40 = arith.addf %37, %39 : vector<8x128xf32>
    %c8_i32 = arith.constant 8 : i32
    %41 = arith.muli %arg1, %c8_i32 : i32
    %c8_i32_20 = arith.constant 8 : i32
    %42 = arith.subi %c8_i32_20, %41 : i32
    %43 = tpu.iota {dimensions = array<i32: 0>} : vector<8x1xi32>
    %44 = vector.broadcast %42 : i32 to vector<8x1xi32>
    %45 = arith.cmpi slt, %43, %44 : vector<8x1xi32>
    %cst_21 = arith.constant 0.000000e+00 : f32
    %46 = vector.shape_cast %45 : vector<8x1xi1> to vector<8x1xi1>
    %47 = vector.broadcast %46 : vector<8x1xi1> to vector<8x128xi1>
    %48 = vector.broadcast %cst_21 : f32 to vector<8x128xf32>
    %49 = arith.select %47, %40, %48 : vector<8x128xi1>, vector<8x128xf32>
    %50 = arith.truncf %49 : vector<8x128xf32> to vector<8x128xbf16>
    %cst_22 = arith.constant dense<0.000000e+00> : vector<8x8xf32>
    %51 = tpu.matmul %13, %12, %cst_22 {dimension_numbers = #tpu.dot_dimension_numbers<[1], [1], [0], [0], [0, 0, 1, 0], [], []>} : vector<8x128xbf16>, vector<8x128xbf16>, vector<8x8xf32> -> vector<8x8xf32>
    %52 = arith.cmpi sle, %22, %21 : vector<8x8xi32>
    %cst_23 = arith.constant 1.000000e+00 : f32
    %53 = vector.broadcast %cst_23 : f32 to vector<8x8xf32>
    %54 = arith.addf %51, %53 : vector<8x8xf32>
    %cst_24 = arith.constant 0.000000e+00 : f32
    %55 = vector.broadcast %cst_24 : f32 to vector<8x8xf32>
    %56 = arith.select %52, %54, %55 : vector<8x8xi1>, vector<8x8xf32>
    %cst_25 = arith.constant dense<0.000000e+00> : vector<8x128xf32>
    %57 = tpu.matmul %13, %16, %cst_25 {dimension_numbers = #tpu.dot_dimension_numbers<[1], [0], [0], [1], [0, 0, 1, 1], [], []>} : vector<8x128xbf16>, vector<128x128xbf16>, vector<8x128xf32> -> vector<8x128xf32>
    %58 = vector.broadcast %15 : vector<1x128xf32> to vector<8x128xf32>
    %59 = arith.addf %57, %58 : vector<8x128xf32>
    %60 = arith.truncf %56 : vector<8x8xf32> to vector<8x8xbf16>
    %cst_26 = arith.constant dense<0.000000e+00> : vector<8x128xf32>
    %61 = tpu.matmul %60, %50, %cst_26 {dimension_numbers = #tpu.dot_dimension_numbers<[1], [0], [0], [1], [0, 0, 1, 1], [], []>} : vector<8x8xbf16>, vector<8x128xbf16>, vector<8x128xf32> -> vector<8x128xf32>
    %cst_27 = arith.constant 1.000000e-01 : f32
    %62 = vector.broadcast %cst_27 : f32 to vector<8x128xf32>
    %63 = arith.mulf %62, %61 : vector<8x128xf32>
    %64 = arith.subf %59, %63 : vector<8x128xf32>
    %c0_28 = arith.constant 0 : index
    %c0_29 = arith.constant 0 : index
    %c0_30 = arith.constant 0 : index
    %65 = vector.load %arg6[%c0_28, %c0_29, %c0_30] : memref<1x8x128xf32, #tpu.memory_space<vmem>>, vector<1x8x128xf32>
    %66 = vector.shape_cast %65 : vector<1x8x128xf32> to vector<8x128xf32>
    %67 = vector.shape_cast %64 : vector<8x128xf32> to vector<1x8x128xf32>
    tpu.vector_store %arg6[%c0_28, %c0_29, %c0_30], %67 {strides = array<i32>} : memref<1x8x128xf32, #tpu.memory_space<vmem>>, vector<1x8x128xf32>,
    %cst_31 = arith.constant dense<0.000000e+00> : vector<128x128xf32>
    %68 = tpu.matmul %12, %50, %cst_31 {dimension_numbers = #tpu.dot_dimension_numbers<[0], [0], [1], [1], [0, 1, 1, 1], [], []>} : vector<8x128xbf16>, vector<8x128xbf16>, vector<128x128xf32> -> vector<128x128xf32>
    %cst_32 = arith.constant 1.000000e-01 : f32
    %69 = vector.broadcast %cst_32 : f32 to vector<128x128xf32>
    %70 = arith.mulf %69, %68 : vector<128x128xf32>
    %71 = arith.subf %14, %70 : vector<128x128xf32>
    %c0_33 = arith.constant 0 : index
    %c0_34 = arith.constant 0 : index
    %72 = vector.load %arg7[%c0_33, %c0_34] : memref<128x128xf32, #tpu.memory_space<vmem>>, vector<128x128xf32>
    tpu.vector_store %arg7[%c0_33, %c0_34], %71 {strides = array<i32>} : memref<128x128xf32, #tpu.memory_space<vmem>>, vector<128x128xf32>,
    %cst_35 = arith.constant dense<0.000000e+00> : vector<128xf32>
    %73 = vector.multi_reduction <add>, %49, %cst_35 [0] : vector<8x128xf32> to vector<128xf32>
    %74 = vector.shape_cast %73 : vector<128xf32> to vector<1x128xf32>
    %cst_36 = arith.constant 1.000000e-01 : f32
    %75 = vector.broadcast %cst_36 : f32 to vector<1x128xf32>
    %76 = arith.mulf %75, %74 : vector<1x128xf32>
    %77 = arith.subf %15, %76 : vector<1x128xf32>
    %c0_37 = arith.constant 0 : index
    %c0_38 = arith.constant 0 : index
    %78 = vector.load %arg8[%c0_37, %c0_38] : memref<1x128xf32, #tpu.memory_space<vmem>>, vector<1x128xf32>
    tpu.vector_store %arg8[%c0_37, %c0_38], %77 {strides = array<i32>} : memref<1x128xf32, #tpu.memory_space<vmem>>, vector<1x128xf32>,
    return
  }
  func.func @transform_0(%arg0: i32, %arg1: i32) -> (i32, i32, i32) {
    %c0_i32 = arith.constant 0 : i32
    %c0_i32_0 = arith.constant 0 : i32
    return %arg0, %arg1, %c0_i32 : i32, i32, i32
  }
  func.func @transform_1(%arg0: i32, %arg1: i32) -> (i32, i32) {
    %c0_i32 = arith.constant 0 : i32
    %c0_i32_0 = arith.constant 0 : i32
    %c0_i32_1 = arith.constant 0 : i32
    return %c0_i32, %c0_i32_0 : i32, i32
  }
  func.func @transform_2(%arg0: i32, %arg1: i32) -> (i32, i32) {
    %c0_i32 = arith.constant 0 : i32
    %c0_i32_0 = arith.constant 0 : i32
    %c0_i32_1 = arith.constant 0 : i32
    return %c0_i32, %c0_i32_0 : i32, i32
  }
  func.func @transform_3(%arg0: i32, %arg1: i32) -> (i32, i32) {
    %c0_i32 = arith.constant 0 : i32
    %c0_i32_0 = arith.constant 0 : i32
    %c0_i32_1 = arith.constant 0 : i32
    return %c0_i32, %c0_i32_0 : i32, i32
  }
  func.func @transform_4(%arg0: i32, %arg1: i32) -> (i32, i32, i32) {
    %c0_i32 = arith.constant 0 : i32
    %c0_i32_0 = arith.constant 0 : i32
    return %arg0, %arg1, %c0_i32 : i32, i32, i32
  }
}

</mosaic_0001>

<llo_original>
// kernel: tpu_custom_call.1
$region0: #{tpu_custom_call.1}
  #allocation0 [shape = 'u32[]', space=smem, size = 0x4, offset = 0x4, fixed_abs, tag = 'smem constant byte address 0x4 - core index']
  #allocation1 [shape = 'u32[144,128]{1,0:T(1,128)}', space=vmem, size = 0x12000, scoped, tag = 'internal scratch']
  #allocation2 [shape = 'f32[128,128]{1,0:T(8,128)}', space=vmem, size = 0x10000, scoped, tag = 'scratch operand']
  #allocation3 [shape = 'f32[1,128]{1,0:T(1,128)}', space=vmem, size = 0x200, scoped, tag = 'scratch operand']
  %s0 = inlined_call_operand.hbm [shape: f32[1,8,32], index: 0, kind: input, shape index: {}]
  %s1 = inlined_call_operand.hbm [shape: f32[32,384], index: 1, kind: input, shape index: {}]
  %s2 = inlined_call_operand.hbm [shape: f32[128,128], index: 2, kind: input, shape index: {}]
  %s3 = inlined_call_operand.vmem [shape: f32[1,128], index: 3, kind: input, shape index: {}]
  %s4 = inlined_call_operand.hbm [shape: f32[1,8,128], index: 4, kind: output, shape index: {}]
  %s5 = sld [smem:[#allocation0]]
  $region42: #{tpu_custom_call.1} parent=0
    _
  %s7 = ssub.s32 1, %s5
  %s8 = scalar_select 0, %s7, %s5
  $region1: #{tpu_custom_call.1} parent=0
    #allocation4 [shape = 'u8[4096]{0}', space=vmem, size = 0x1000, scoped, tag = 'input window, operand 0, single buffered']
    #allocation5 [shape = 's32[1]{0}', space=sflag, size = 0x4, scoped, tag = 'scoped memory for tpu_custom_call.1']
    #allocation6 [shape = 's32[1]{0}', space=sflag, size = 0x4, scoped, tag = 'scoped memory for tpu_custom_call.1']
    #allocation7 [shape = 'u8[49152]{0}', space=vmem, size = 0xc000, scoped, tag = 'input window, operand 1, single buffered']
    #allocation8 [shape = 's32[1]{0}', space=sflag, size = 0x4, scoped, tag = 'scoped memory for tpu_custom_call.1']
    #allocation9 [shape = 'u8[65536]{0}', space=vmem, size = 0x10000, scoped, tag = 'input window, operand 2, single buffered']
    #allocation10 [shape = 'u8[4096]{0}', space=vmem, size = 0x1000, scoped, tag = 'output window, operand 0, single buffered']
    %9 = vsyncpa [#allocation5], 0
    %10 = vsyncpa [#allocation8], 0
    %11 = vsyncpa [#allocation6], 0
    // Predicated region
    $region2: #{tpu_custom_call.1} parent=1 // pred_check
      _
    $region3: #{tpu_custom_call.1} parent=1 // pred_check_branch
      %13 = sbr.rel (0) target = $region5
    $region4: #{tpu_custom_call.1} parent=1 // pred_region
      %s15 = ssub.s32 128, 128
      %16 = vsyncadd [#allocation5], %s15
      %s18 = sshll.u32 [#allocation4], 4
      %s19 = int_to_ptr.vmem [resolvable:$true] %s18
      %21 = dma.hbm_to_vmem [thread:$0]  %s0, 128, %s19, [#allocation5]
    $region5: #{tpu_custom_call.1} parent=1 // pred_fallthru
      _
    // Predicated region
    $region6: #{tpu_custom_call.1} parent=1 // pred_check
      _
    $region7: #{tpu_custom_call.1} parent=1 // pred_check_branch
      %23 = sbr.rel (0) target = $region9
    $region8: #{tpu_custom_call.1} parent=1 // pred_region
      %s25 = ssub.s32 1536, 1536
      %26 = vsyncadd [#allocation8], %s25
      %s27 = sshll.u32 [#allocation7], 4
      %s28 = int_to_ptr.vmem [resolvable:$true] %s27
      %33 = dma.hbm_to_vmem [thread:$0]  %s1, 1536, %s28, [#allocation8], 384, 384, 24
    $region9: #{tpu_custom_call.1} parent=1 // pred_fallthru
      _
    // Predicated region
    $region10: #{tpu_custom_call.1} parent=1 // pred_check
      _
    $region11: #{tpu_custom_call.1} parent=1 // pred_check_branch
      %35 = sbr.rel (0) target = $region13
    $region12: #{tpu_custom_call.1} parent=1 // pred_region
      %s37 = ssub.s32 2048, 2048
      %38 = vsyncadd [#allocation8], %s37
      %s39 = sshll.u32 [#allocation9], 4
      %s40 = int_to_ptr.vmem [resolvable:$true] %s39
      %45 = dma.hbm_to_vmem [thread:$0]  %s2, 2048, %s40, [#allocation8], 128, 128, 8
    $region13: #{tpu_custom_call.1} parent=1 // pred_fallthru
      _
    // Predicated region
    $region14: #{tpu_custom_call.1} parent=1 // pred_check
      _
    $region15: #{tpu_custom_call.1} parent=1 // pred_check_branch
      %47 = sbr.rel (0) target = $region17
    $region16: #{tpu_custom_call.1} parent=1 // pred_region
      _
    $region17: #{tpu_custom_call.1} parent=1 // pred_fallthru
      _
    // Predicated region
    $region18: #{tpu_custom_call.1} parent=1 // pred_check
      _
    $region19: #{tpu_custom_call.1} parent=1 // pred_check_branch
      %49 = sbr.rel (0) target = $region21
    $region20: #{tpu_custom_call.1} parent=1 // pred_region
      %50 = dma.done [#allocation5], 128
    $region21: #{tpu_custom_call.1} parent=1 // pred_fallthru
      _
    // Predicated region
    $region22: #{tpu_custom_call.1} parent=1 // pred_check
      _
    $region23: #{tpu_custom_call.1} parent=1 // pred_check_branch
      %52 = sbr.rel (0) target = $region25
    $region24: #{tpu_custom_call.1} parent=1 // pred_region
      %53 = dma.done [#allocation8], 1536
    $region25: #{tpu_custom_call.1} parent=1 // pred_fallthru
      _
    // Predicated region
    $region26: #{tpu_custom_call.1} parent=1 // pred_check
      _
    $region27: #{tpu_custom_call.1} parent=1 // pred_check_branch
      %55 = sbr.rel (0) target = $region29
    $region28: #{tpu_custom_call.1} parent=1 // pred_region
      %56 = dma.done [#allocation8], 2048
    $region29: #{tpu_custom_call.1} parent=1 // pred_fallthru
      _
    %p58 = scmp.eq.s32.totalorder 0, 0
    // Predicated region
    $region30: #{tpu_custom_call.1} parent=1 // pred_check
      %p59 = pneg %p58
    $region31: #{tpu_custom_call.1} parent=1 // pred_check_branch
      %61 = sbr.rel (%p59) target = $region33
    $region32: #{tpu_custom_call.1} parent=1 // pred_region
      %v62 = vld [vmem:[#allocation9] sm:$0xff]
      %v63 = vld [vmem:[#allocation9 + $0x8] sm:$0xff]
      %v64 = vld [vmem:[#allocation9 + $0x10] sm:$0xff]
      %v65 = vld [vmem:[#allocation9 + $0x18] sm:$0xff]
      %v66 = vld [vmem:[#allocation9 + $0x20] sm:$0xff]
      %v67 = vld [vmem:[#allocation9 + $0x28] sm:$0xff]
      %v68 = vld [vmem:[#allocation9 + $0x30] sm:$0xff]
      %v69 = vld [vmem:[#allocation9 + $0x38] sm:$0xff]
      %v70 = vld [vmem:[#allocation9 + $0x40] sm:$0xff]
      %v71 = vld [vmem:[#allocation9 + $0x48] sm:$0xff]
      %v72 = vld [vmem:[#allocation9 + $0x50] sm:$0xff]
      %v73 = vld [vmem:[#allocation9 + $0x58] sm:$0xff]
      %v74 = vld [vmem:[#allocation9 + $0x60] sm:$0xff]
      %v75 = vld [vmem:[#allocation9 + $0x68] sm:$0xff]
      %v76 = vld [vmem:[#allocation9 + $0x70] sm:$0xff]
      %v77 = vld [vmem:[#allocation9 + $0x78] sm:$0xff]
      %78 = vst [vmem:[#allocation2] sm:$0xff] %v62
      %79 = vst [vmem:[#allocation2 + $0x8] sm:$0xff] %v63
      %80 = vst [vmem:[#allocation2 + $0x10] sm:$0xff] %v64
      %81 = vst [vmem:[#allocation2 + $0x18] sm:$0xff] %v65
      %82 = vst [vmem:[#allocation2 + $0x20] sm:$0xff] %v66
      %83 = vst [vmem:[#allocation2 + $0x28] sm:$0xff] %v67
      %84 = vst [vmem:[#allocation2 + $0x30] sm:$0xff] %v68
      %85 = vst [vmem:[#allocation2 + $0x38] sm:$0xff] %v69
      %86 = vst [vmem:[#allocation2 + $0x40] sm:$0xff] %v70
      %87 = vst [vmem:[#allocation2 + $0x48] sm:$0xff] %v71
      %88 = vst [vmem:[#allocation2 + $0x50] sm:$0xff] %v72
      %89 = vst [vmem:[#allocation2 + $0x58] sm:$0xff] %v73
      %90 = vst [vmem:[#allocation2 + $0x60] sm:$0xff] %v74
      %91 = vst [vmem:[#allocation2 + $0x68] sm:$0xff] %v75
      %92 = vst [vmem:[#allocation2 + $0x70] sm:$0xff] %v76
      %93 = vst [vmem:[#allocation2 + $0x78] sm:$0xff] %v77
      %v94 = vld [vmem:[%s3] sm:$0x1]
      %95 = vst [vmem:[#allocation3] sm:$0x1] %v94
    $region33: #{tpu_custom_call.1} parent=1 // pred_fallthru
      _
    %v96 = vld [vmem:[#allocation4] sm:$0xff]
    %v97 = vpack.c.bf16 %v96, %v96
    %v98 = vld [vmem:[#allocation7] sm:$0xff]
    %v99 = vld [vmem:[#allocation7 + $0x8] sm:$0xff]
    %v100 = vld [vmem:[#allocation7 + $0x10] sm:$0xff]
    %v101 = vld [vmem:[#allocation7 + $0x18] sm:$0xff]
    %v102 = vld [vmem:[#allocation7 + $0x20] sm:$0xff]
    %v103 = vld [vmem:[#allocation7 + $0x28] sm:$0xff]
    %v104 = vld [vmem:[#allocation7 + $0x30] sm:$0xff]
    %v105 = vld [vmem:[#allocation7 + $0x38] sm:$0xff]
    %v106 = vld [vmem:[#allocation7 + $0x40] sm:$0xff]
    %v107 = vld [vmem:[#allocation7 + $0x48] sm:$0xff]
    %v108 = vld [vmem:[#allocation7 + $0x50] sm:$0xff]
    %v109 = vld [vmem:[#allocation7 + $0x58] sm:$0xff]
    %v110 = vpack.c.bf16 %v101, %v98
    %v111 = vpack.c.bf16 %v102, %v99
    %v112 = vpack.c.bf16 %v103, %v100
    %v113 = vpack.c.bf16 %v107, %v104
    %v114 = vpack.c.bf16 %v108, %v105
    %v115 = vpack.c.bf16 %v109, %v106
    %vm116 = vcmask 261120
    %v118 = vsel %vm116, %v97, 0
    %120 = vmatprep.subr.bf16.mxu0 0
    %121 = vmatpush1.bf16.msra.mxu0 0
    %122 = vmatprep.subr.bf16.mxu0 0
    %123 = vmatpush1.bf16.msra.mxu0 0
    %124 = vmatprep.subr.bf16.mxu0 0
    %125 = vmatpush1.bf16.msra.mxu0 0
    %126 = vmatprep.subr.bf16.mxu0 0
    %127 = vmatpush1.bf16.msra.mxu0 0
    %128 = vmatprep.subr.bf16.mxu0 0
    %129 = vmatpush1.bf16.msra.mxu0 0
    %130 = vmatprep.subr.bf16.mxu0 0
    %131 = vmatpush1.bf16.msra.mxu0 0
    %132 = vmatprep.subr.bf16.mxu0 %v114
    %133 = vmatpush1.bf16.msra.mxu0 %v113
    %134 = vmatprep.subr.bf16.mxu0 %v111
    %135 = vmatpush1.bf16.msra.mxu0 %v110
    %136 = vmatprep.subr.bf16.mxu0 0
    %137 = vmatpush2.bf16.msra.mxu0 0
    %138 = vmatprep.subr.bf16.mxu0 0
    %139 = vmatpush2.bf16.msra.mxu0 0
    %140 = vmatprep.subr.bf16.mxu0 0
    %141 = vmatpush2.bf16.msra.mxu0 0
    %142 = vmatprep.subr.bf16.mxu0 0
    %143 = vmatpush2.bf16.msra.mxu0 0
    %144 = vmatprep.subr.bf16.mxu0 0
    %145 = vmatpush2.bf16.msra.mxu0 0
    %146 = vmatprep.subr.bf16.mxu0 0
    %147 = vmatpush2.bf16.msra.mxu0 0
    %148 = vmatprep.subr.bf16.mxu0 0
    %149 = vmatpush2.bf16.msra.mxu0 0
    %150 = vmatprep.subr.bf16.mxu0 0
    %151 = vmatpush2.bf16.msra.mxu0 0
    %152 = vmatprep.mubr.bf16.mxu0 0
    %153 = vmatmul.mubr.bf16.gmra.mxu0 %v118
    %v154 = vpop.f32.mrf.mxu0
    %v155 = vadd.f32 0.0, %v154
    %v156 = vpop.f32.mrf.mxu0
    %v157 = vadd.f32 0.0, %v156
    %v158 = vpop.f32.mrf.mxu0
    %v159 = vpop.f32.mrf.mxu0
    %160 = vdwg.mxu0
    %161 = vmatprep.subr.bf16.mxu0 0
    %162 = vmatpush1.bf16.msra.mxu0 0
    %163 = vmatprep.subr.bf16.mxu0 0
    %164 = vmatpush1.bf16.msra.mxu0 0
    %165 = vmatprep.subr.bf16.mxu0 0
    %166 = vmatpush1.bf16.msra.mxu0 0
    %167 = vmatprep.subr.bf16.mxu0 0
    %168 = vmatpush1.bf16.msra.mxu0 0
    %169 = vmatprep.subr.bf16.mxu0 0
    %170 = vmatpush1.bf16.msra.mxu0 0
    %171 = vmatprep.subr.bf16.mxu0 0
    %172 = vmatpush1.bf16.msra.mxu0 0
    %173 = vmatprep.subr.bf16.mxu0 0
    %174 = vmatpush1.bf16.msra.mxu0 %v115
    %175 = vmatprep.subr.bf16.mxu0 0
    %176 = vmatpush1.bf16.msra.mxu0 %v112
    %177 = vmatprep.subr.bf16.mxu0 0
    %178 = vmatpush2.bf16.msra.mxu0 0
    %179 = vmatprep.subr.bf16.mxu0 0
    %180 = vmatpush2.bf16.msra.mxu0 0
    %181 = vmatprep.subr.bf16.mxu0 0
    %182 = vmatpush2.bf16.msra.mxu0 0
    %183 = vmatprep.subr.bf16.mxu0 0
    %184 = vmatpush2.bf16.msra.mxu0 0
    %185 = vmatprep.subr.bf16.mxu0 0
    %186 = vmatpush2.bf16.msra.mxu0 0
    %187 = vmatprep.subr.bf16.mxu0 0
    %188 = vmatpush2.bf16.msra.mxu0 0
    %189 = vmatprep.subr.bf16.mxu0 0
    %190 = vmatpush2.bf16.msra.mxu0 0
    %191 = vmatprep.subr.bf16.mxu0 0
    %192 = vmatpush2.bf16.msra.mxu0 0
    %193 = vmatprep.mubr.bf16.mxu0 0
    %194 = vmatmul.mubr.bf16.gmra.mxu0 %v118
    %v195 = vpop.f32.mrf.mxu0
    %v196 = vadd.f32 0.0, %v195
    %v197 = vpop.f32.mrf.mxu0
    %v198 = vpop.f32.mrf.mxu0
    %v199 = vpop.f32.mrf.mxu0
    %200 = vdwg.mxu0
    %v201 = vpack.c.bf16 %v155, %v155
    %v202 = vpack.c.bf16 %v196, %v196
    %v203 = vld [vmem:[#allocation2] sm:$0xff]
    %v204 = vld [vmem:[#allocation2 + $0x8] sm:$0xff]
    %v205 = vld [vmem:[#allocation2 + $0x10] sm:$0xff]
    %v206 = vld [vmem:[#allocation2 + $0x18] sm:$0xff]
    %v207 = vld [vmem:[#allocation2 + $0x20] sm:$0xff]
    %v208 = vld [vmem:[#allocation2 + $0x28] sm:$0xff]
    %v209 = vld [vmem:[#allocation2 + $0x30] sm:$0xff]
    %v210 = vld [vmem:[#allocation2 + $0x38] sm:$0xff]
    %v211 = vld [vmem:[#allocation2 + $0x40] sm:$0xff]
    %v212 = vld [vmem:[#allocation2 + $0x48] sm:$0xff]
    %v213 = vld [vmem:[#allocation2 + $0x50] sm:$0xff]
    %v214 = vld [vmem:[#allocation2 + $0x58] sm:$0xff]
    %v215 = vld [vmem:[#allocation2 + $0x60] sm:$0xff]
    %v216 = vld [vmem:[#allocation2 + $0x68] sm:$0xff]
    %v217 = vld [vmem:[#allocation2 + $0x70] sm:$0xff]
    %v218 = vld [vmem:[#allocation2 + $0x78] sm:$0xff]
    %v219 = vld [vmem:[#allocation3] sm:$0x1]
    %v220 = vpack.c.bf16 %v204, %v203
    %v221 = vpack.c.bf16 %v206, %v205
    %v222 = vpack.c.bf16 %v208, %v207
    %v223 = vpack.c.bf16 %v210, %v209
    %v224 = vpack.c.bf16 %v212, %v211
    %v225 = vpack.c.bf16 %v214, %v213
    %v226 = vpack.c.bf16 %v216, %v215
    %v227 = vpack.c.bf16 %v218, %v217
    %v229 = vlaneseq
    %v230 = vshrl.u32 %v229, 7
    %v231 = vsub.s32 0, %v230
    %v232 = vrot.slane %v219, %v231
    %234 = vmatprep.subr.bf16.mxu0 0
    %235 = vmatpush1.bf16.msra.mxu0 %v227
    %236 = vmatprep.subr.bf16.mxu0 0
    %237 = vmatpush1.bf16.msra.mxu0 %v226
    %238 = vmatprep.subr.bf16.mxu0 0
    %239 = vmatpush1.bf16.msra.mxu0 %v225
    %240 = vmatprep.subr.bf16.mxu0 0
    %241 = vmatpush1.bf16.msra.mxu0 %v224
    %242 = vmatprep.subr.bf16.mxu0 0
    %243 = vmatpush1.bf16.msra.mxu0 %v223
    %244 = vmatprep.subr.bf16.mxu0 0
    %245 = vmatpush1.bf16.msra.mxu0 %v222
    %246 = vmatprep.subr.bf16.mxu0 0
    %247 = vmatpush1.bf16.msra.mxu0 %v221
    %248 = vmatprep.subr.bf16.mxu0 0
    %249 = vmatpush1.bf16.msra.mxu0 %v220
    %250 = vmatprep.subr.bf16.mxu0 0
    %251 = vmatpush2.bf16.msra.mxu0 0
    %252 = vmatprep.subr.bf16.mxu0 0
    %253 = vmatpush2.bf16.msra.mxu0 0
    %254 = vmatprep.subr.bf16.mxu0 0
    %255 = vmatpush2.bf16.msra.mxu0 0
    %256 = vmatprep.subr.bf16.mxu0 0
    %257 = vmatpush2.bf16.msra.mxu0 0
    %258 = vmatprep.subr.bf16.mxu0 0
    %259 = vmatpush2.bf16.msra.mxu0 0
    %260 = vmatprep.subr.bf16.mxu0 0
    %261 = vmatpush2.bf16.msra.mxu0 0
    %262 = vmatprep.subr.bf16.mxu0 0
    %263 = vmatpush2.bf16.msra.mxu0 0
    %264 = vmatprep.subr.bf16.mxu0 0
    %265 = vmatpush2.bf16.msra.mxu0 0
    %266 = vmatprep.mubr.bf16.mxu0 0
    %267 = vmatmul.mubr.bf16.gmra.mxu0 %v201
    %v268 = vpop.f32.mrf.mxu0
    %v269 = vadd.f32 %v232, %v268
    %v270 = vpop.f32.mrf.mxu0
    %v271 = vpop.f32.mrf.mxu0
    %v272 = vpop.f32.mrf.mxu0
    %273 = vdwg.mxu0
    %v274 = vsub.f32 %v269, %v157
    %v275 = vlaneseq
    %v276 = vshrl.u32 %v275, 7
    %v277 = vlaneseq
    %v278 = vand.u32 %v277, 127
    %vm279 = vcmp.lt.s32.totalorder %v278, %v276
    %280 = vmatprep.subr.bf16.mxu0 0
    %281 = vmatpush1.bf16.xpose.msra.mxu0 0
    %282 = vmatprep.subr.bf16.mxu0 0
    %283 = vmatpush1.bf16.xpose.msra.mxu0 0
    %284 = vmatprep.subr.bf16.mxu0 0
    %285 = vmatpush1.bf16.xpose.msra.mxu0 0
    %286 = vmatprep.subr.bf16.mxu0 0
    %287 = vmatpush1.bf16.xpose.msra.mxu0 0
    %288 = vmatprep.subr.bf16.mxu0 0
    %289 = vmatpush1.bf16.xpose.msra.mxu0 0
    %290 = vmatprep.subr.bf16.mxu0 0
    %291 = vmatpush1.bf16.xpose.msra.mxu0 0
    %292 = vmatprep.subr.bf16.mxu0 0
    %293 = vmatpush1.bf16.xpose.msra.mxu0 0
    %294 = vmatprep.subr.bf16.mxu0 0
    %295 = vmatpush1.bf16.xpose.msra.mxu0 %v201
    %296 = vmatprep.subr.bf16.mxu0 0
    %297 = vmatpush2.bf16.xpose.msra.mxu0 0
    %298 = vmatprep.subr.bf16.mxu0 0
    %299 = vmatpush2.bf16.xpose.msra.mxu0 0
    %300 = vmatprep.subr.bf16.mxu0 0
    %301 = vmatpush2.bf16.xpose.msra.mxu0 0
    %302 = vmatprep.subr.bf16.mxu0 0
    %303 = vmatpush2.bf16.xpose.msra.mxu0 0
    %304 = vmatprep.subr.bf16.mxu0 0
    %305 = vmatpush2.bf16.xpose.msra.mxu0 0
    %306 = vmatprep.subr.bf16.mxu0 0
    %307 = vmatpush2.bf16.xpose.msra.mxu0 0
    %308 = vmatprep.subr.bf16.mxu0 0
    %309 = vmatpush2.bf16.xpose.msra.mxu0 0
    %310 = vmatprep.subr.bf16.mxu0 0
    %311 = vmatpush2.bf16.xpose.msra.mxu0 0
    %312 = vmatprep.mubr.bf16.mxu0 0
    %313 = vmatmul.mubr.bf16.gmra.mxu0 %v201
    %v314 = vpop.f32.mrf.mxu0
    %v315 = vadd.f32 1.0, %v314
    %v316 = vpop.f32.mrf.mxu0
    %v317 = vpop.f32.mrf.mxu0
    %v318 = vpop.f32.mrf.mxu0
    %319 = vdwg.mxu0
    %v320 = vmul.f32 %v315, -0.00625
    %v321 = vsel %vm279, %v320, 0.0
    %v322 = vmul.f32 %v274, 0.0625
    %vm323 = vcmask 64512
    %v325 = vsel %vm323, %v321, 0
    %327 = vmatprep.subr.mxu0 0.0
    %328 = vmatpush1.msra.mxu0 0.0
    %329 = vmatprep.subr.mxu0 0.0
    %330 = vmatpush1.msra.mxu0 0.0
    %331 = vmatprep.subr.mxu0 0.0
    %332 = vmatpush1.msra.mxu0 0.0
    %333 = vmatprep.subr.mxu0 0.0
    %334 = vmatpush1.msra.mxu0 0.0
    %335 = vmatprep.subr.mxu0 0.0
    %336 = vmatpush1.msra.mxu0 0.0
    %337 = vmatprep.subr.mxu0 0.0
    %338 = vmatpush1.msra.mxu0 0.0
    %339 = vmatprep.subr.mxu0 0.0
    %340 = vmatpush1.msra.mxu0 0.0
    %341 = vmatprep.subr.mxu0 0.0
    %342 = vmatpush1.msra.mxu0 0.0
    %343 = vmatprep.subr.mxu0 0.0
    %344 = vmatpush1.msra.mxu0 0.0
    %345 = vmatprep.subr.mxu0 0.0
    %346 = vmatpush1.msra.mxu0 0.0
    %347 = vmatprep.subr.mxu0 0.0
    %348 = vmatpush1.msra.mxu0 0.0
    %349 = vmatprep.subr.mxu0 0.0
    %350 = vmatpush1.msra.mxu0 0.0
    %351 = vmatprep.subr.mxu0 0.0
    %352 = vmatpush1.msra.mxu0 0.0
    %353 = vmatprep.subr.mxu0 0.0
    %354 = vmatpush1.msra.mxu0 0.0
    %355 = vmatprep.subr.mxu0 0.0
    %356 = vmatpush1.msra.mxu0 0.0
    %357 = vmatprep.subr.mxu0 0.0
    %358 = vmatpush1.msra.mxu0 %v322
    %359 = vmatprep.subr.mxu0 0.0
    %360 = vmatpush2.msra.mxu0 0.0
    %361 = vmatprep.subr.mxu0 0.0
    %362 = vmatpush2.msra.mxu0 0.0
    %363 = vmatprep.subr.mxu0 0.0
    %364 = vmatpush2.msra.mxu0 0.0
    %365 = vmatprep.subr.mxu0 0.0
    %366 = vmatpush2.msra.mxu0 0.0
    %367 = vmatprep.subr.mxu0 0.0
    %368 = vmatpush2.msra.mxu0 0.0
    %369 = vmatprep.subr.mxu0 0.0
    %370 = vmatpush2.msra.mxu0 0.0
    %371 = vmatprep.subr.mxu0 0.0
    %372 = vmatpush2.msra.mxu0 0.0
    %373 = vmatprep.subr.mxu0 0.0
    %374 = vmatpush2.msra.mxu0 0.0
    %375 = vmatprep.subr.mxu0 0.0
    %376 = vmatpush2.msra.mxu0 0.0
    %377 = vmatprep.subr.mxu0 0.0
    %378 = vmatpush2.msra.mxu0 0.0
    %379 = vmatprep.subr.mxu0 0.0
    %380 = vmatpush2.msra.mxu0 0.0
    %381 = vmatprep.subr.mxu0 0.0
    %382 = vmatpush2.msra.mxu0 0.0
    %383 = vmatprep.subr.mxu0 0.0
    %384 = vmatpush2.msra.mxu0 0.0
    %385 = vmatprep.subr.mxu0 0.0
    %386 = vmatpush2.msra.mxu0 0.0
    %387 = vmatprep.subr.mxu0 0.0
    %388 = vmatpush2.msra.mxu0 0.0
    %389 = vmatprep.subr.mxu0 0.0
    %390 = vmatpush2.msra.mxu0 0.0
    %391 = vmatprep.mubr.f32.mxu0 0.0
    %392 = vmatmul.mubr.f32.gmra.mxu0 %v325
    %v393 = vpop.f32.mrf.mxu0
    %v394 = vadd.f32 0.0, %v393
    %v395 = vpop.f32.mrf.mxu0
    %396 = vdwg.mxu0
    %v397 = vadd.f32 %v322, %v394
    %398 = vmatprep.subr.mxu0 0.0
    %399 = vmatpush1.msra.mxu0 0.0
    %400 = vmatprep.subr.mxu0 0.0
    %401 = vmatpush1.msra.mxu0 0.0
    %402 = vmatprep.subr.mxu0 0.0
    %403 = vmatpush1.msra.mxu0 0.0
    %404 = vmatprep.subr.mxu0 0.0
    %405 = vmatpush1.msra.mxu0 0.0
    %406 = vmatprep.subr.mxu0 0.0
    %407 = vmatpush1.msra.mxu0 0.0
    %408 = vmatprep.subr.mxu0 0.0
    %409 = vmatpush1.msra.mxu0 0.0
    %410 = vmatprep.subr.mxu0 0.0
    %411 = vmatpush1.msra.mxu0 0.0
    %412 = vmatprep.subr.mxu0 0.0
    %413 = vmatpush1.msra.mxu0 0.0
    %414 = vmatprep.subr.mxu0 0.0
    %415 = vmatpush1.msra.mxu0 0.0
    %416 = vmatprep.subr.mxu0 0.0
    %417 = vmatpush1.msra.mxu0 0.0
    %418 = vmatprep.subr.mxu0 0.0
    %419 = vmatpush1.msra.mxu0 0.0
    %420 = vmatprep.subr.mxu0 0.0
    %421 = vmatpush1.msra.mxu0 0.0
    %422 = vmatprep.subr.mxu0 0.0
    %423 = vmatpush1.msra.mxu0 0.0
    %424 = vmatprep.subr.mxu0 0.0
    %425 = vmatpush1.msra.mxu0 0.0
    %426 = vmatprep.subr.mxu0 0.0
    %427 = vmatpush1.msra.mxu0 0.0
    %428 = vmatprep.subr.mxu0 0.0
    %429 = vmatpush1.msra.mxu0 %v321
    %430 = vmatprep.subr.mxu0 0.0
    %431 = vmatpush2.msra.mxu0 0.0
    %432 = vmatprep.subr.mxu0 0.0
    %433 = vmatpush2.msra.mxu0 0.0
    %434 = vmatprep.subr.mxu0 0.0
    %435 = vmatpush2.msra.mxu0 0.0
    %436 = vmatprep.subr.mxu0 0.0
    %437 = vmatpush2.msra.mxu0 0.0
    %438 = vmatprep.subr.mxu0 0.0
    %439 = vmatpush2.msra.mxu0 0.0
    %440 = vmatprep.subr.mxu0 0.0
    %441 = vmatpush2.msra.mxu0 0.0
    %442 = vmatprep.subr.mxu0 0.0
    %443 = vmatpush2.msra.mxu0 0.0
    %444 = vmatprep.subr.mxu0 0.0
    %445 = vmatpush2.msra.mxu0 0.0
    %446 = vmatprep.subr.mxu0 0.0
    %447 = vmatpush2.msra.mxu0 0.0
    %448 = vmatprep.subr.mxu0 0.0
    %449 = vmatpush2.msra.mxu0 0.0
    %450 = vmatprep.subr.mxu0 0.0
    %451 = vmatpush2.msra.mxu0 0.0
    %452 = vmatprep.subr.mxu0 0.0
    %453 = vmatpush2.msra.mxu0 0.0
    %454 = vmatprep.subr.mxu0 0.0
    %455 = vmatpush2.msra.mxu0 0.0
    %456 = vmatprep.subr.mxu0 0.0
    %457 = vmatpush2.msra.mxu0 0.0
    %458 = vmatprep.subr.mxu0 0.0
    %459 = vmatpush2.msra.mxu0 0.0
    %460 = vmatprep.subr.mxu0 0.0
    %461 = vmatpush2.msra.mxu0 0.0
    %462 = vmatprep.mubr.f32.mxu0 0.0
    %463 = vmatmul.mubr.f32.gmra.mxu0 %v325
    %v464 = vpop.f32.mrf.mxu0
    %v465 = vadd.f32 0.0, %v464
    %v466 = vpop.f32.mrf.mxu0
    %467 = vdwg.mxu0
    %v469 = vsel %vm323, %v465, 0
    %471 = vmatprep.subr.mxu0 0.0
    %472 = vmatpush1.msra.mxu0 0.0
    %473 = vmatprep.subr.mxu0 0.0
    %474 = vmatpush1.msra.mxu0 0.0
    %475 = vmatprep.subr.mxu0 0.0
    %476 = vmatpush1.msra.mxu0 0.0
    %477 = vmatprep.subr.mxu0 0.0
    %478 = vmatpush1.msra.mxu0 0.0
    %479 = vmatprep.subr.mxu0 0.0
    %480 = vmatpush1.msra.mxu0 0.0
    %481 = vmatprep.subr.mxu0 0.0
    %482 = vmatpush1.msra.mxu0 0.0
    %483 = vmatprep.subr.mxu0 0.0
    %484 = vmatpush1.msra.mxu0 0.0
    %485 = vmatprep.subr.mxu0 0.0
    %486 = vmatpush1.msra.mxu0 0.0
    %487 = vmatprep.subr.mxu0 0.0
    %488 = vmatpush1.msra.mxu0 0.0
    %489 = vmatprep.subr.mxu0 0.0
    %490 = vmatpush1.msra.mxu0 0.0
    %491 = vmatprep.subr.mxu0 0.0
    %492 = vmatpush1.msra.mxu0 0.0
    %493 = vmatprep.subr.mxu0 0.0
    %494 = vmatpush1.msra.mxu0 0.0
    %495 = vmatprep.subr.mxu0 0.0
    %496 = vmatpush1.msra.mxu0 0.0
    %497 = vmatprep.subr.mxu0 0.0
    %498 = vmatpush1.msra.mxu0 0.0
    %499 = vmatprep.subr.mxu0 0.0
    %500 = vmatpush1.msra.mxu0 0.0
    %501 = vmatprep.subr.mxu0 0.0
    %502 = vmatpush1.msra.mxu0 %v397
    %503 = vmatprep.subr.mxu0 0.0
    %504 = vmatpush2.msra.mxu0 0.0
    %505 = vmatprep.subr.mxu0 0.0
    %506 = vmatpush2.msra.mxu0 0.0
    %507 = vmatprep.subr.mxu0 0.0
    %508 = vmatpush2.msra.mxu0 0.0
    %509 = vmatprep.subr.mxu0 0.0
    %510 = vmatpush2.msra.mxu0 0.0
    %511 = vmatprep.subr.mxu0 0.0
    %512 = vmatpush2.msra.mxu0 0.0
    %513 = vmatprep.subr.mxu0 0.0
    %514 = vmatpush2.msra.mxu0 0.0
    %515 = vmatprep.subr.mxu0 0.0
    %516 = vmatpush2.msra.mxu0 0.0
    %517 = vmatprep.subr.mxu0 0.0
    %518 = vmatpush2.msra.mxu0 0.0
    %519 = vmatprep.subr.mxu0 0.0
    %520 = vmatpush2.msra.mxu0 0.0
    %521 = vmatprep.subr.mxu0 0.0
    %522 = vmatpush2.msra.mxu0 0.0
    %523 = vmatprep.subr.mxu0 0.0
    %524 = vmatpush2.msra.mxu0 0.0
    %525 = vmatprep.subr.mxu0 0.0
    %526 = vmatpush2.msra.mxu0 0.0
    %527 = vmatprep.subr.mxu0 0.0
    %528 = vmatpush2.msra.mxu0 0.0
    %529 = vmatprep.subr.mxu0 0.0
    %530 = vmatpush2.msra.mxu0 0.0
    %531 = vmatprep.subr.mxu0 0.0
    %532 = vmatpush2.msra.mxu0 0.0
    %533 = vmatprep.subr.mxu0 0.0
    %534 = vmatpush2.msra.mxu0 0.0
    %535 = vmatprep.mubr.f32.mxu0 0.0
    %536 = vmatmul.mubr.f32.gmra.mxu0 %v469
    %v537 = vpop.f32.mrf.mxu0
    %v538 = vadd.f32 0.0, %v537
    %v539 = vpop.f32.mrf.mxu0
    %540 = vdwg.mxu0
    %v541 = vadd.f32 %v397, %v538
    %542 = vmatprep.subr.mxu0 0.0
    %543 = vmatpush1.msra.mxu0 0.0
    %544 = vmatprep.subr.mxu0 0.0
    %545 = vmatpush1.msra.mxu0 0.0
    %546 = vmatprep.subr.mxu0 0.0
    %547 = vmatpush1.msra.mxu0 0.0
    %548 = vmatprep.subr.mxu0 0.0
    %549 = vmatpush1.msra.mxu0 0.0
    %550 = vmatprep.subr.mxu0 0.0
    %551 = vmatpush1.msra.mxu0 0.0
    %552 = vmatprep.subr.mxu0 0.0
    %553 = vmatpush1.msra.mxu0 0.0
    %554 = vmatprep.subr.mxu0 0.0
    %555 = vmatpush1.msra.mxu0 0.0
    %556 = vmatprep.subr.mxu0 0.0
    %557 = vmatpush1.msra.mxu0 0.0
    %558 = vmatprep.subr.mxu0 0.0
    %559 = vmatpush1.msra.mxu0 0.0
    %560 = vmatprep.subr.mxu0 0.0
    %561 = vmatpush1.msra.mxu0 0.0
    %562 = vmatprep.subr.mxu0 0.0
    %563 = vmatpush1.msra.mxu0 0.0
    %564 = vmatprep.subr.mxu0 0.0
    %565 = vmatpush1.msra.mxu0 0.0
    %566 = vmatprep.subr.mxu0 0.0
    %567 = vmatpush1.msra.mxu0 0.0
    %568 = vmatprep.subr.mxu0 0.0
    %569 = vmatpush1.msra.mxu0 0.0
    %570 = vmatprep.subr.mxu0 0.0
    %571 = vmatpush1.msra.mxu0 0.0
    %572 = vmatprep.subr.mxu0 0.0
    %573 = vmatpush1.msra.mxu0 %v465
    %574 = vmatprep.subr.mxu0 0.0
    %575 = vmatpush2.msra.mxu0 0.0
    %576 = vmatprep.subr.mxu0 0.0
    %577 = vmatpush2.msra.mxu0 0.0
    %578 = vmatprep.subr.mxu0 0.0
    %579 = vmatpush2.msra.mxu0 0.0
    %580 = vmatprep.subr.mxu0 0.0
    %581 = vmatpush2.msra.mxu0 0.0
    %582 = vmatprep.subr.mxu0 0.0
    %583 = vmatpush2.msra.mxu0 0.0
    %584 = vmatprep.subr.mxu0 0.0
    %585 = vmatpush2.msra.mxu0 0.0
    %586 = vmatprep.subr.mxu0 0.0
    %587 = vmatpush2.msra.mxu0 0.0
    %588 = vmatprep.subr.mxu0 0.0
    %589 = vmatpush2.msra.mxu0 0.0
    %590 = vmatprep.subr.mxu0 0.0
    %591 = vmatpush2.msra.mxu0 0.0
    %592 = vmatprep.subr.mxu0 0.0
    %593 = vmatpush2.msra.mxu0 0.0
    %594 = vmatprep.subr.mxu0 0.0
    %595 = vmatpush2.msra.mxu0 0.0
    %596 = vmatprep.subr.mxu0 0.0
    %597 = vmatpush2.msra.mxu0 0.0
    %598 = vmatprep.subr.mxu0 0.0
    %599 = vmatpush2.msra.mxu0 0.0
    %600 = vmatprep.subr.mxu0 0.0
    %601 = vmatpush2.msra.mxu0 0.0
    %602 = vmatprep.subr.mxu0 0.0
    %603 = vmatpush2.msra.mxu0 0.0
    %604 = vmatprep.subr.mxu0 0.0
    %605 = vmatpush2.msra.mxu0 0.0
    %606 = vmatprep.mubr.f32.mxu0 0.0
    %607 = vmatmul.mubr.f32.gmra.mxu0 %v469
    %v608 = vpop.f32.mrf.mxu0
    %v609 = vadd.f32 0.0, %v608
    %v610 = vpop.f32.mrf.mxu0
    %611 = vdwg.mxu0
    %v613 = vsel %vm323, %v609, 0
    %615 = vmatprep.subr.mxu0 0.0
    %616 = vmatpush1.msra.mxu0 0.0
    %617 = vmatprep.subr.mxu0 0.0
    %618 = vmatpush1.msra.mxu0 0.0
    %619 = vmatprep.subr.mxu0 0.0
    %620 = vmatpush1.msra.mxu0 0.0
    %621 = vmatprep.subr.mxu0 0.0
    %622 = vmatpush1.msra.mxu0 0.0
    %623 = vmatprep.subr.mxu0 0.0
    %624 = vmatpush1.msra.mxu0 0.0
    %625 = vmatprep.subr.mxu0 0.0
    %626 = vmatpush1.msra.mxu0 0.0
    %627 = vmatprep.subr.mxu0 0.0
    %628 = vmatpush1.msra.mxu0 0.0
    %629 = vmatprep.subr.mxu0 0.0
    %630 = vmatpush1.msra.mxu0 0.0
    %631 = vmatprep.subr.mxu0 0.0
    %632 = vmatpush1.msra.mxu0 0.0
    %633 = vmatprep.subr.mxu0 0.0
    %634 = vmatpush1.msra.mxu0 0.0
    %635 = vmatprep.subr.mxu0 0.0
    %636 = vmatpush1.msra.mxu0 0.0
    %637 = vmatprep.subr.mxu0 0.0
    %638 = vmatpush1.msra.mxu0 0.0
    %639 = vmatprep.subr.mxu0 0.0
    %640 = vmatpush1.msra.mxu0 0.0
    %641 = vmatprep.subr.mxu0 0.0
    %642 = vmatpush1.msra.mxu0 0.0
    %643 = vmatprep.subr.mxu0 0.0
    %644 = vmatpush1.msra.mxu0 0.0
    %645 = vmatprep.subr.mxu0 0.0
    %646 = vmatpush1.msra.mxu0 %v541
    %647 = vmatprep.subr.mxu0 0.0
    %648 = vmatpush2.msra.mxu0 0.0
    %649 = vmatprep.subr.mxu0 0.0
    %650 = vmatpush2.msra.mxu0 0.0
    %651 = vmatprep.subr.mxu0 0.0
    %652 = vmatpush2.msra.mxu0 0.0
    %653 = vmatprep.subr.mxu0 0.0
    %654 = vmatpush2.msra.mxu0 0.0
    %655 = vmatprep.subr.mxu0 0.0
    %656 = vmatpush2.msra.mxu0 0.0
    %657 = vmatprep.subr.mxu0 0.0
    %658 = vmatpush2.msra.mxu0 0.0
    %659 = vmatprep.subr.mxu0 0.0
    %660 = vmatpush2.msra.mxu0 0.0
    %661 = vmatprep.subr.mxu0 0.0
    %662 = vmatpush2.msra.mxu0 0.0
    %663 = vmatprep.subr.mxu0 0.0
    %664 = vmatpush2.msra.mxu0 0.0
    %665 = vmatprep.subr.mxu0 0.0
    %666 = vmatpush2.msra.mxu0 0.0
    %667 = vmatprep.subr.mxu0 0.0
    %668 = vmatpush2.msra.mxu0 0.0
    %669 = vmatprep.subr.mxu0 0.0
    %670 = vmatpush2.msra.mxu0 0.0
    %671 = vmatprep.subr.mxu0 0.0
    %672 = vmatpush2.msra.mxu0 0.0
    %673 = vmatprep.subr.mxu0 0.0
    %674 = vmatpush2.msra.mxu0 0.0
    %675 = vmatprep.subr.mxu0 0.0
    %676 = vmatpush2.msra.mxu0 0.0
    %677 = vmatprep.subr.mxu0 0.0
    %678 = vmatpush2.msra.mxu0 0.0
    %679 = vmatprep.mubr.f32.mxu0 0.0
    %680 = vmatmul.mubr.f32.gmra.mxu0 %v613
    %v681 = vpop.f32.mrf.mxu0
    %v682 = vadd.f32 0.0, %v681
    %v683 = vpop.f32.mrf.mxu0
    %684 = vdwg.mxu0
    %v685 = vadd.f32 %v541, %v682
    %s686 = smul.u32 0, 8
    %s687 = ssub.s32 8, %s686
    %v688 = vstv %s687
    %vm689 = vcmp.lt.s32.totalorder %v276, %v688
    %v690 = vsel %vm689, 1, 0
    %vm691 = vcmp.eq.s32.totalorder %v690, 1
    %v692 = vsel %vm691, %v685, 0.0
    %v693 = vpack.c.bf16 %v692, %v692
    %vm694 = vcmp.le.s32.totalorder %v278, %v276
    %695 = vmatprep.subr.bf16.mxu0 0
    %696 = vmatpush1.bf16.xpose.msra.mxu0 0
    %697 = vmatprep.subr.bf16.mxu0 0
    %698 = vmatpush1.bf16.xpose.msra.mxu0 0
    %699 = vmatprep.subr.bf16.mxu0 0
    %700 = vmatpush1.bf16.xpose.msra.mxu0 0
    %701 = vmatprep.subr.bf16.mxu0 0
    %702 = vmatpush1.bf16.xpose.msra.mxu0 0
    %703 = vmatprep.subr.bf16.mxu0 0
    %704 = vmatpush1.bf16.xpose.msra.mxu0 0
    %705 = vmatprep.subr.bf16.mxu0 0
    %706 = vmatpush1.bf16.xpose.msra.mxu0 0
    %707 = vmatprep.subr.bf16.mxu0 0
    %708 = vmatpush1.bf16.xpose.msra.mxu0 0
    %709 = vmatprep.subr.bf16.mxu0 0
    %710 = vmatpush1.bf16.xpose.msra.mxu0 %v201
    %711 = vmatprep.subr.bf16.mxu0 0
    %712 = vmatpush2.bf16.xpose.msra.mxu0 0
    %713 = vmatprep.subr.bf16.mxu0 0
    %714 = vmatpush2.bf16.xpose.msra.mxu0 0
    %715 = vmatprep.subr.bf16.mxu0 0
    %716 = vmatpush2.bf16.xpose.msra.mxu0 0
    %717 = vmatprep.subr.bf16.mxu0 0
    %718 = vmatpush2.bf16.xpose.msra.mxu0 0
    %719 = vmatprep.subr.bf16.mxu0 0
    %720 = vmatpush2.bf16.xpose.msra.mxu0 0
    %721 = vmatprep.subr.bf16.mxu0 0
    %722 = vmatpush2.bf16.xpose.msra.mxu0 0
    %723 = vmatprep.subr.bf16.mxu0 0
    %724 = vmatpush2.bf16.xpose.msra.mxu0 0
    %725 = vmatprep.subr.bf16.mxu0 0
    %726 = vmatpush2.bf16.xpose.msra.mxu0 0
    %727 = vmatprep.mubr.bf16.mxu0 0
    %728 = vmatmul.mubr.bf16.gmra.mxu0 %v202
    %v729 = vpop.f32.mrf.mxu0
    %v730 = vadd.f32 1.0, %v729
    %v731 = vpop.f32.mrf.mxu0
    %v732 = vpop.f32.mrf.mxu0
    %v733 = vpop.f32.mrf.mxu0
    %734 = vdwg.mxu0
    %v735 = vsel %vm694, %v730, 0.0
    %736 = vmatprep.subr.bf16.mxu0 0
    %737 = vmatpush1.bf16.msra.mxu0 %v227
    %738 = vmatprep.subr.bf16.mxu0 0
    %739 = vmatpush1.bf16.msra.mxu0 %v226
    %740 = vmatprep.subr.bf16.mxu0 0
    %741 = vmatpush1.bf16.msra.mxu0 %v225
    %742 = vmatprep.subr.bf16.mxu0 0
    %743 = vmatpush1.bf16.msra.mxu0 %v224
    %744 = vmatprep.subr.bf16.mxu0 0
    %745 = vmatpush1.bf16.msra.mxu0 %v223
    %746 = vmatprep.subr.bf16.mxu0 0
    %747 = vmatpush1.bf16.msra.mxu0 %v222
    %748 = vmatprep.subr.bf16.mxu0 0
    %749 = vmatpush1.bf16.msra.mxu0 %v221
    %750 = vmatprep.subr.bf16.mxu0 0
    %751 = vmatpush1.bf16.msra.mxu0 %v220
    %752 = vmatprep.subr.bf16.mxu0 0
    %753 = vmatpush2.bf16.msra.mxu0 0
    %754 = vmatprep.subr.bf16.mxu0 0
    %755 = vmatpush2.bf16.msra.mxu0 0
    %756 = vmatprep.subr.bf16.mxu0 0
    %757 = vmatpush2.bf16.msra.mxu0 0
    %758 = vmatprep.subr.bf16.mxu0 0
    %759 = vmatpush2.bf16.msra.mxu0 0
    %760 = vmatprep.subr.bf16.mxu0 0
    %761 = vmatpush2.bf16.msra.mxu0 0
    %762 = vmatprep.subr.bf16.mxu0 0
    %763 = vmatpush2.bf16.msra.mxu0 0
    %764 = vmatprep.subr.bf16.mxu0 0
    %765 = vmatpush2.bf16.msra.mxu0 0
    %766 = vmatprep.subr.bf16.mxu0 0
    %767 = vmatpush2.bf16.msra.mxu0 0
    %768 = vmatprep.mubr.bf16.mxu0 0
    %769 = vmatmul.mubr.bf16.gmra.mxu0 %v202
    %v770 = vpop.f32.mrf.mxu0
    %v771 = vadd.f32 %v232, %v770
    %v772 = vpop.f32.mrf.mxu0
    %v773 = vpop.f32.mrf.mxu0
    %v774 = vpop.f32.mrf.mxu0
    %775 = vdwg.mxu0
    %v776 = vpack.c.bf16 %v735, %v735
    %v778 = vsel %vm323, %v776, 0
    %vm780 = vcmask 1043456
    %v782 = vsel %vm780, %v693, 0
    %784 = vmatprep.subr.bf16.mxu0 0
    %785 = vmatpush1.bf16.msra.mxu0 0
    %786 = vmatprep.subr.bf16.mxu0 0
    %787 = vmatpush1.bf16.msra.mxu0 0
    %788 = vmatprep.subr.bf16.mxu0 0
    %789 = vmatpush1.bf16.msra.mxu0 0
    %790 = vmatprep.subr.bf16.mxu0 0
    %791 = vmatpush1.bf16.msra.mxu0 0
    %792 = vmatprep.subr.bf16.mxu0 0
    %793 = vmatpush1.bf16.msra.mxu0 0
    %794 = vmatprep.subr.bf16.mxu0 0
    %795 = vmatpush1.bf16.msra.mxu0 0
    %796 = vmatprep.subr.bf16.mxu0 0
    %797 = vmatpush1.bf16.msra.mxu0 0
    %798 = vmatprep.subr.bf16.mxu0 0
    %799 = vmatpush1.bf16.msra.mxu0 %v782
    %800 = vmatprep.subr.bf16.mxu0 0
    %801 = vmatpush2.bf16.msra.mxu0 0
    %802 = vmatprep.subr.bf16.mxu0 0
    %803 = vmatpush2.bf16.msra.mxu0 0
    %804 = vmatprep.subr.bf16.mxu0 0
    %805 = vmatpush2.bf16.msra.mxu0 0
    %806 = vmatprep.subr.bf16.mxu0 0
    %807 = vmatpush2.bf16.msra.mxu0 0
    %808 = vmatprep.subr.bf16.mxu0 0
    %809 = vmatpush2.bf16.msra.mxu0 0
    %810 = vmatprep.subr.bf16.mxu0 0
    %811 = vmatpush2.bf16.msra.mxu0 0
    %812 = vmatprep.subr.bf16.mxu0 0
    %813 = vmatpush2.bf16.msra.mxu0 0
    %814 = vmatprep.subr.bf16.mxu0 0
    %815 = vmatpush2.bf16.msra.mxu0 0
    %816 = vmatprep.mubr.bf16.mxu0 0
    %817 = vmatmul.mubr.bf16.gmra.mxu0 %v778
    %v818 = vpop.f32.mrf.mxu0
    %v819 = vadd.f32 0.0, %v818
    %v820 = vpop.f32.mrf.mxu0
    %v821 = vpop.f32.mrf.mxu0
    %v822 = vpop.f32.mrf.mxu0
    %823 = vdwg.mxu0
    %v824 = vmul.f32 %v819, 0.1
    %v825 = vsub.f32 %v771, %v824
    %826 = vst [vmem:[#allocation10] sm:$0xff] %v825
    %827 = vxpose.xlu0.c.b16.start [1/8] %v201, 128
    %828 = vxpose.xlu0.c.b16.cont [2/8] 0, 128
    %829 = vxpose.xlu0.c.b16.cont [3/8] 0, 128
    %830 = vxpose.xlu0.c.b16.cont [4/8] 0, 128
    %831 = vxpose.xlu0.c.b16.cont [5/8] 0, 128
    %832 = vxpose.xlu0.c.b16.cont [6/8] 0, 128
    %833 = vxpose.xlu0.c.b16.cont [7/8] 0, 128
    %834 = vxpose.xlu0.c.b16.end [8/8] 0, 128
    %v835 = vpop.trf.xlu0
    %v836 = vpop.trf.xlu0
    %v837 = vpop.trf.xlu0
    %v838 = vpop.trf.xlu0
    %v839 = vpop.trf.xlu0
    %v840 = vpop.trf.xlu0
    %v841 = vpop.trf.xlu0
    %v842 = vpop.trf.xlu0
    %v844 = vsel %vm323, %v835, 0
    %v847 = vsel %vm323, %v836, 0
    %v850 = vsel %vm323, %v837, 0
    %v853 = vsel %vm323, %v838, 0
    %v856 = vsel %vm323, %v839, 0
    %v859 = vsel %vm323, %v840, 0
    %v862 = vsel %vm323, %v841, 0
    %v865 = vsel %vm323, %v842, 0
    %867 = vmatprep.subr.bf16.mxu0 0
    %868 = vmatpush1.bf16.msra.mxu0 0
    %869 = vmatprep.subr.bf16.mxu0 0
    %870 = vmatpush1.bf16.msra.mxu0 0
    %871 = vmatprep.subr.bf16.mxu0 0
    %872 = vmatpush1.bf16.msra.mxu0 0
    %873 = vmatprep.subr.bf16.mxu0 0
    %874 = vmatpush1.bf16.msra.mxu0 0
    %875 = vmatprep.subr.bf16.mxu0 0
    %876 = vmatpush1.bf16.msra.mxu0 0
    %877 = vmatprep.subr.bf16.mxu0 0
    %878 = vmatpush1.bf16.msra.mxu0 0
    %879 = vmatprep.subr.bf16.mxu0 0
    %880 = vmatpush1.bf16.msra.mxu0 0
    %881 = vmatprep.subr.bf16.mxu0 0
    %882 = vmatpush1.bf16.msra.mxu0 %v782
    %883 = vmatprep.subr.bf16.mxu0 0
    %884 = vmatpush2.bf16.msra.mxu0 0
    %885 = vmatprep.subr.bf16.mxu0 0
    %886 = vmatpush2.bf16.msra.mxu0 0
    %887 = vmatprep.subr.bf16.mxu0 0
    %888 = vmatpush2.bf16.msra.mxu0 0
    %889 = vmatprep.subr.bf16.mxu0 0
    %890 = vmatpush2.bf16.msra.mxu0 0
    %891 = vmatprep.subr.bf16.mxu0 0
    %892 = vmatpush2.bf16.msra.mxu0 0
    %893 = vmatprep.subr.bf16.mxu0 0
    %894 = vmatpush2.bf16.msra.mxu0 0
    %895 = vmatprep.subr.bf16.mxu0 0
    %896 = vmatpush2.bf16.msra.mxu0 0
    %897 = vmatprep.subr.bf16.mxu0 0
    %898 = vmatpush2.bf16.msra.mxu0 0
    %899 = vmatprep.mubr.bf16.mxu0 0
    %900 = vmatmul.mubr.bf16.gmra.mxu0 %v844
    %v901 = vpop.f32.mrf.mxu0
    %v902 = vadd.f32 0.0, %v901
    %v903 = vpop.f32.mrf.mxu0
    %v904 = vpop.f32.mrf.mxu0
    %v905 = vadd.f32 0.0, %v904
    %v906 = vpop.f32.mrf.mxu0
    %907 = vmatprep.mubr.bf16.mxu0 0
    %908 = vmatmul.mubr.bf16.gmra.mxu0 %v847
    %v909 = vpop.f32.mrf.mxu0
    %v910 = vadd.f32 0.0, %v909
    %v911 = vpop.f32.mrf.mxu0
    %v912 = vpop.f32.mrf.mxu0
    %v913 = vadd.f32 0.0, %v912
    %v914 = vpop.f32.mrf.mxu0
    %915 = vmatprep.mubr.bf16.mxu0 0
    %916 = vmatmul.mubr.bf16.gmra.mxu0 %v850
    %v917 = vpop.f32.mrf.mxu0
    %v918 = vadd.f32 0.0, %v917
    %v919 = vpop.f32.mrf.mxu0
    %v920 = vpop.f32.mrf.mxu0
    %v921 = vadd.f32 0.0, %v920
    %v922 = vpop.f32.mrf.mxu0
    %923 = vmatprep.mubr.bf16.mxu0 0
    %924 = vmatmul.mubr.bf16.gmra.mxu0 %v853
    %v925 = vpop.f32.mrf.mxu0
    %v926 = vadd.f32 0.0, %v925
    %v927 = vpop.f32.mrf.mxu0
    %v928 = vpop.f32.mrf.mxu0
    %v929 = vadd.f32 0.0, %v928
    %v930 = vpop.f32.mrf.mxu0
    %931 = vmatprep.mubr.bf16.mxu0 0
    %932 = vmatmul.mubr.bf16.gmra.mxu0 %v856
    %v933 = vpop.f32.mrf.mxu0
    %v934 = vadd.f32 0.0, %v933
    %v935 = vpop.f32.mrf.mxu0
    %v936 = vpop.f32.mrf.mxu0
    %v937 = vadd.f32 0.0, %v936
    %v938 = vpop.f32.mrf.mxu0
    %939 = vmatprep.mubr.bf16.mxu0 0
    %940 = vmatmul.mubr.bf16.gmra.mxu0 %v859
    %v941 = vpop.f32.mrf.mxu0
    %v942 = vadd.f32 0.0, %v941
    %v943 = vpop.f32.mrf.mxu0
    %v944 = vpop.f32.mrf.mxu0
    %v945 = vadd.f32 0.0, %v944
    %v946 = vpop.f32.mrf.mxu0
    %947 = vmatprep.mubr.bf16.mxu0 0
    %948 = vmatmul.mubr.bf16.gmra.mxu0 %v862
    %v949 = vpop.f32.mrf.mxu0
    %v950 = vadd.f32 0.0, %v949
    %v951 = vpop.f32.mrf.mxu0
    %v952 = vpop.f32.mrf.mxu0
    %v953 = vadd.f32 0.0, %v952
    %v954 = vpop.f32.mrf.mxu0
    %955 = vmatprep.mubr.bf16.mxu0 0
    %956 = vmatmul.mubr.bf16.gmra.mxu0 %v865
    %v957 = vpop.f32.mrf.mxu0
    %v958 = vadd.f32 0.0, %v957
    %v959 = vpop.f32.mrf.mxu0
    %v960 = vpop.f32.mrf.mxu0
    %v961 = vadd.f32 0.0, %v960
    %v962 = vpop.f32.mrf.mxu0
    %963 = vdwg.mxu0
    %v964 = vmul.f32 %v902, 0.1
    %v965 = vmul.f32 %v905, 0.1
    %v966 = vmul.f32 %v910, 0.1
    %v967 = vmul.f32 %v913, 0.1
    %v968 = vmul.f32 %v918, 0.1
    %v969 = vmul.f32 %v921, 0.1
    %v970 = vmul.f32 %v926, 0.1
    %v971 = vmul.f32 %v929, 0.1
    %v972 = vmul.f32 %v934, 0.1
    %v973 = vmul.f32 %v937, 0.1
    %v974 = vmul.f32 %v942, 0.1
    %v975 = vmul.f32 %v945, 0.1
    %v976 = vmul.f32 %v950, 0.1
    %v977 = vmul.f32 %v953, 0.1
    %v978 = vmul.f32 %v958, 0.1
    %v979 = vmul.f32 %v961, 0.1
    %v980 = vsub.f32 %v203, %v964
    %v981 = vsub.f32 %v204, %v965
    %v982 = vsub.f32 %v205, %v966
    %v983 = vsub.f32 %v206, %v967
    %v984 = vsub.f32 %v207, %v968
    %v985 = vsub.f32 %v208, %v969
    %v986 = vsub.f32 %v209, %v970
    %v987 = vsub.f32 %v210, %v971
    %v988 = vsub.f32 %v211, %v972
    %v989 = vsub.f32 %v212, %v973
    %v990 = vsub.f32 %v213, %v974
    %v991 = vsub.f32 %v214, %v975
    %v992 = vsub.f32 %v215, %v976
    %v993 = vsub.f32 %v216, %v977
    %v994 = vsub.f32 %v217, %v978
    %v995 = vsub.f32 %v218, %v979
    %996 = vst [vmem:[#allocation2] sm:$0xff] %v980
    %997 = vst [vmem:[#allocation2 + $0x8] sm:$0xff] %v981
    %998 = vst [vmem:[#allocation2 + $0x10] sm:$0xff] %v982
    %999 = vst [vmem:[#allocation2 + $0x18] sm:$0xff] %v983
    %1000 = vst [vmem:[#allocation2 + $0x20] sm:$0xff] %v984
    %1001 = vst [vmem:[#allocation2 + $0x28] sm:$0xff] %v985
    %1002 = vst [vmem:[#allocation2 + $0x30] sm:$0xff] %v986
    %1003 = vst [vmem:[#allocation2 + $0x38] sm:$0xff] %v987
    %1004 = vst [vmem:[#allocation2 + $0x40] sm:$0xff] %v988
    %1005 = vst [vmem:[#allocation2 + $0x48] sm:$0xff] %v989
    %1006 = vst [vmem:[#allocation2 + $0x50] sm:$0xff] %v990
    %1007 = vst [vmem:[#allocation2 + $0x58] sm:$0xff] %v991
    %1008 = vst [vmem:[#allocation2 + $0x60] sm:$0xff] %v992
    %1009 = vst [vmem:[#allocation2 + $0x68] sm:$0xff] %v993
    %1010 = vst [vmem:[#allocation2 + $0x70] sm:$0xff] %v994
    %1011 = vst [vmem:[#allocation2 + $0x78] sm:$0xff] %v995
    %v1012 = vrot.slane %v692, 4
    %v1013 = vadd.f32 %v692, %v1012
    %v1014 = vrot.slane %v1013, 2
    %v1015 = vadd.f32 %v1013, %v1014
    %v1016 = vrot.slane %v1015, 1
    %v1017 = vadd.f32 %v1015, %v1016
    %v1018 = vmul.f32 %v1017, 0.1
    %v1019 = vsub.f32 %v219, %v1018
    %1020 = vst [vmem:[#allocation3] sm:$0x1] %v1019
    // Predicated region
    $region34: #{tpu_custom_call.1} parent=1 // pred_check
      _
    $region35: #{tpu_custom_call.1} parent=1 // pred_check_branch
      %1022 = sbr.rel (0) target = $region37
    $region36: #{tpu_custom_call.1} parent=1 // pred_region
      %s1024 = ssub.s32 128, 128
      %1025 = vsyncadd [#allocation6], %s1024
      %s1027 = sshll.u32 [#allocation10], 4
      %s1028 = int_to_ptr.vmem [resolvable:$true] %s1027
      %1030 = dma.vmem_to_hbm [thread:$0]  %s1028, 128, %s4, [#allocation6]
    $region37: #{tpu_custom_call.1} parent=1 // pred_fallthru
      _
    // Predicated region
    $region38: #{tpu_custom_call.1} parent=1 // pred_check
      _
    $region39: #{tpu_custom_call.1} parent=1 // pred_check_branch
      %1032 = sbr.rel (0) target = $region41
    $region40: #{tpu_custom_call.1} parent=1 // pred_region
      %1033 = dma.done [#allocation6], 128
    $region41: #{tpu_custom_call.1} parent=1 // pred_fallthru
      _
    %1034 = vsyncpa [#allocation5], 1
    %1035 = vsyncpa [#allocation8], 1
    %1036 = vsyncpa [#allocation6], 1

</llo_original>
